<compile_context>
chip_gen: v5e
topology: v5e:2x2
jax: 0.10.0
libtpu: 0.0.40
codegen_flags: <defaults>
</compile_context>

<pallas_src>
import functools

import jax
import jax.numpy as jnp
from jax import lax
from jax.experimental import pallas as pl
from jax.experimental.pallas import tpu as pltpu

_LANE = 128
_SUBLANE_MULT = 32                     # row multiple covering f32 / bf16 / int8 packing
_PAD_MULTIPLE = _SUBLANE_MULT * _LANE  # flatten-pad granularity (4096 elements)
_BLOCK_BYTES = 2 * 1024 * 1024         # per-stream per-buffer DMA step (2 MiB)
_VMEM_LIMIT_BYTES = 32 * 1024 * 1024   # explicit scoped-VMEM request


def _cdiv(a, b):
    return -(-a // b)


@functools.lru_cache(maxsize=None)
def _detect_num_tensorcores():
    """Best-effort TensorCores-per-chip (2 on v7x-class chips, 1 on v5e/v6e)."""
    try:
        info = pltpu.get_tpu_info()
    except Exception:
        return 1
    for name in ("tensorcores_per_chip", "num_tensorcores", "num_cores",
                 "core_count", "cores_per_chip"):
        v = getattr(info, name, None)
        if isinstance(v, int) and not isinstance(v, bool) and v >= 1:
            return v
    return 1


# ----------------------------- Pallas kernels ------------------------------ #

def _fold8(x, block_rows):
    """(block_rows, 128) f32 -> (8, 128) f32 via vreg-wise VPU adds (no cross-lane)."""
    return jnp.sum(x.reshape(block_rows // 8, 8, _LANE), axis=0)


def _reduce_kernel(p_ref, t_ref, out_ref, *, rows, block_rows, steps, nblocks,
                   need_partial, clamp):
    """Accumulate sum((p - t)^2) into an (8, 128) resident f32 output block."""
    s = pl.program_id(0)
    k = pl.program_id(1)
    logical = s * steps + k

    d = p_ref[...].astype(jnp.float32) - t_ref[...].astype(jnp.float32)
    sq = d * d

    @pl.when(k == 0)
    def _():
        out_ref[...] = jnp.zeros_like(out_ref)

    if need_partial:
        valid_rows = rows - (nblocks - 1) * block_rows   # static

        @pl.when(logical == nblocks - 1)
        def _():
            rid = lax.broadcasted_iota(jnp.int32, sq.shape, 0)
            out_ref[...] += _fold8(jnp.where(rid < valid_rows, sq, 0.0), block_rows)

        fast = logical < nblocks - 1
    elif clamp:
        fast = logical < nblocks
    else:
        fast = None

    def _fast_add():
        out_ref[...] += _fold8(sq, block_rows)

    if fast is None:
        _fast_add()
    else:
        pl.when(fast)(_fast_add)


def _reduce_kernel_w(p_ref, t_ref, w_ref, out_ref, wout_ref, *, rows, block_rows,
                     steps, nblocks, need_partial, clamp):
    """Accumulate sum((p - t)^2 * w) and sum(w) into (8, 128) resident f32 blocks."""
    s = pl.program_id(0)
    k = pl.program_id(1)
    logical = s * steps + k

    w = w_ref[...].astype(jnp.float32)
    d = p_ref[...].astype(jnp.float32) - t_ref[...].astype(jnp.float32)
    sq = d * d * w

    @pl.when(k == 0)
    def _():
        out_ref[...] = jnp.zeros_like(out_ref)
        wout_ref[...] = jnp.zeros_like(wout_ref)

    if need_partial:
        valid_rows = rows - (nblocks - 1) * block_rows   # static

        @pl.when(logical == nblocks - 1)
        def _():
            rid = lax.broadcasted_iota(jnp.int32, sq.shape, 0)
            valid = rid < valid_rows
            out_ref[...] += _fold8(jnp.where(valid, sq, 0.0), block_rows)
            wout_ref[...] += _fold8(jnp.where(valid, w, 0.0), block_rows)

        fast = logical < nblocks - 1
    elif clamp:
        fast = logical < nblocks
    else:
        fast = None

    def _fast_add():
        out_ref[...] += _fold8(sq, block_rows)
        wout_ref[...] += _fold8(w, block_rows)

    if fast is None:
        _fast_add()
    else:
        pl.when(fast)(_fast_add)


def _ew_kernel(p_ref, t_ref, o_ref, *, loss_weight):
    """Elementwise loss_weight * (p - t)^2 in the output dtype."""
    d = p_ref[...].astype(jnp.float32) - t_ref[...].astype(jnp.float32)
    sq = d * d
    if loss_weight != 1.0:
        sq = sq * jnp.float32(loss_weight)
    o_ref[...] = sq.astype(o_ref.dtype)


def _ew_kernel_w(p_ref, t_ref, w_ref, o_ref, *, loss_weight):
    """Elementwise loss_weight * (p - t)^2 * w in the output dtype."""
    d = p_ref[...].astype(jnp.float32) - t_ref[...].astype(jnp.float32)
    sq = d * d * w_ref[...].astype(jnp.float32)
    if loss_weight != 1.0:
        sq = sq * jnp.float32(loss_weight)
    o_ref[...] = sq.astype(o_ref.dtype)


# ------------------------------ JAX glue ----------------------------------- #

def _to_rows(x):
    """View x flattened as (rows, 128) with rows a multiple of 32 (zero-padded)."""
    flat = jnp.reshape(x, (-1,))
    n = flat.shape[0]
    pad = (-n) % _PAD_MULTIPLE
    if pad:
        # TODO(synk): aligned sizes are copy-free; ragged sizes take one small pad copy.
        flat = jnp.pad(flat, (0, pad))
    return flat.reshape(-1, _LANE), n


def _block_rows_for(rows, max_itemsize):
    """Dtype-aware block rows: constant ~2 MiB per stream per buffer."""
    br = _BLOCK_BYTES // (_LANE * max_itemsize)
    br = max(_SUBLANE_MULT, (br // _SUBLANE_MULT) * _SUBLANE_MULT)
    return min(br, rows)


def _reduce_sums(p2, t2, w2=None):
    """Returns f32 scalars: sum((p-t)^2 [* w]) and (if weighted) sum(w)."""
    rows = p2.shape[0]
    streams = (p2, t2) if w2 is None else (p2, t2, w2)
    max_isz = max(s.dtype.itemsize for s in streams)
    block_rows = _block_rows_for(rows, max_isz)
    nblocks = _cdiv(rows, block_rows)

    # 2-way core split only on multi-TensorCore chips with enough work;
    # otherwise one accumulator and no clamp / mask overhead in the steady state.
    num_splits = 2 if (_detect_num_tensorcores() >= 2 and nblocks >= 4) else 1
    steps = _cdiv(nblocks, num_splits)
    clamp = num_splits * steps != nblocks
    need_partial = (rows % block_rows) != 0

    if clamp:
        in_map = lambda s, k: (jnp.minimum(s * steps + k, nblocks - 1), 0)
    else:
        in_map = lambda s, k: (s * steps + k, 0)

    in_spec = pl.BlockSpec((block_rows, _LANE), in_map)
    out_spec = pl.BlockSpec((8, _LANE), lambda s, k: (s, 0))
    part_shape = jax.ShapeDtypeStruct((num_splits * 8, _LANE), jnp.float32)
    n = rows * _LANE
    out_bytes = num_splits * 8 * _LANE * 4

    kw = dict(rows=rows, block_rows=block_rows, steps=steps, nblocks=nblocks,
              need_partial=need_partial, clamp=clamp)
    if w2 is None:
        kernel = functools.partial(_reduce_kernel, **kw)
        in_specs, args = [in_spec, in_spec], (p2, t2)
        out_shape, out_specs = part_shape, out_spec
        flops = 3 * n
        bytes_accessed = n * (p2.dtype.itemsize + t2.dtype.itemsize) + out_bytes
    else:
        kernel = functools.partial(_reduce_kernel_w, **kw)
        in_specs, args = [in_spec, in_spec, in_spec], (p2, t2, w2)
        out_shape, out_specs = (part_shape, part_shape), [out_spec, out_spec]
        flops = 5 * n
        bytes_accessed = (n * (p2.dtype.itemsize + t2.dtype.itemsize
                               + w2.dtype.itemsize) + 2 * out_bytes)

    result = pl.pallas_call(
        kernel,
        out_shape=out_shape,
        grid_spec=pltpu.PrefetchScalarGridSpec(
            num_scalar_prefetch=0,
            grid=(num_splits, steps),
            in_specs=in_specs,
            out_specs=out_specs,
        ),
        compiler_params=pltpu.CompilerParams(
            dimension_semantics=("parallel", "arbitrary"),
            vmem_limit_bytes=_VMEM_LIMIT_BYTES),
        cost_estimate=pl.CostEstimate(flops=flops, transcendentals=0,
                                      bytes_accessed=bytes_accessed),
    )(*args)

    if w2 is None:
        return jnp.sum(result), None
    loss_part, w_part = result
    return jnp.sum(loss_part), jnp.sum(w_part)


def _elementwise_loss(p2, t2, w2, loss_weight, out_dtype):
    rows = p2.shape[0]
    in_streams = [p2, t2] + ([w2] if w2 is not None else [])
    out_isz = jnp.dtype(out_dtype).itemsize
    max_isz = max([s.dtype.itemsize for s in in_streams] + [out_isz])
    block_rows = _block_rows_for(rows, max_isz)
    grid = (_cdiv(rows, block_rows),)
    spec = pl.BlockSpec((block_rows, _LANE), lambda i: (i, 0))
    n = rows * _LANE

    if w2 is None:
        kernel = functools.partial(_ew_kernel, loss_weight=float(loss_weight))
        in_specs, args = [spec, spec], (p2, t2)
        flops = 3 * n
        bytes_accessed = n * (p2.dtype.itemsize + t2.dtype.itemsize + out_isz)
    else:
        kernel = functools.partial(_ew_kernel_w, loss_weight=float(loss_weight))
        in_specs, args = [spec, spec, spec], (p2, t2, w2)
        flops = 4 * n
        bytes_accessed = n * (p2.dtype.itemsize + t2.dtype.itemsize
                              + w2.dtype.itemsize + out_isz)

    return pl.pallas_call(
        kernel,
        out_shape=jax.ShapeDtypeStruct((rows, _LANE), out_dtype),
        grid_spec=pltpu.PrefetchScalarGridSpec(
            num_scalar_prefetch=0,
            grid=grid,
            in_specs=in_specs,
            out_specs=spec,
        ),
        compiler_params=pltpu.CompilerParams(
            dimension_semantics=("parallel",),
            vmem_limit_bytes=_VMEM_LIMIT_BYTES),
        cost_estimate=pl.CostEstimate(flops=flops, transcendentals=0,
                                      bytes_accessed=bytes_accessed),
    )(*args)


class MSELoss:
    """JAX/Pallas port of basicsr MSELoss (weighted_loss + weight_reduce_loss)."""

    def __init__(self, loss_weight=1.0, reduction='mean'):
        if reduction not in ('none', 'mean', 'sum'):
            raise ValueError(
                f"Unsupported reduction mode: {reduction}. "
                f"Supported ones are: ['none', 'mean', 'sum']")
        self.loss_weight = loss_weight
        self.reduction = reduction

    def __call__(self, pred, target, weight=None, **kwargs):
        shape = pred.shape
        p2, n = _to_rows(pred)
        t2, _ = _to_rows(target)

        w2 = None
        denom_override = None
        if weight is not None:
            if tuple(weight.shape) == tuple(shape):
                w2, _ = _to_rows(weight)
            else:
                # basicsr allows a weight whose channel dim is 1 (broadcast over C).
                # The 'mean' denominator is weight.sum() (times C when the channel
                # dim is 1), computed on the *unbroadcast* weight.
                # TODO(synk): stream the compact weight with its own BlockSpec instead
                # of materializing the broadcast (saves ~2 HBM passes on this path).
                w_full = jnp.broadcast_to(weight, shape)
                w2, _ = _to_rows(w_full)
                w_sum = jnp.sum(weight.astype(jnp.float32))
                if weight.ndim > 1 and weight.shape[1] == 1:
                    w_sum = w_sum * shape[1]
                denom_override = w_sum

        if self.reduction == 'none':
            out2 = _elementwise_loss(p2, t2, w2, self.loss_weight, pred.dtype)
            if out2.shape[0] * _LANE != n:
                return out2.reshape(-1)[:n].reshape(shape)
            return out2.reshape(shape)

        sum_loss, sum_w = _reduce_sums(p2, t2, w2)
        if self.reduction == 'sum':
            return (self.loss_weight * sum_loss).astype(pred.dtype)
        # reduction == 'mean'
        if weight is None:
            result = self.loss_weight * (sum_loss / jnp.float32(n))
        else:
            denom = denom_override if denom_override is not None else sum_w
            result = self.loss_weight * (sum_loss / denom)
        return result.astype(pred.dtype)


# --------------------------------- demo ------------------------------------ #

if __name__ == "__main__":
    key = jax.random.PRNGKey(0)
    k1, k2, k3 = jax.random.split(key, 3)
    N, C, H, W = 2, 4, 16, 16
    pred = jax.random.normal(k1, (N, C, H, W), jnp.float32)
    target = jax.random.normal(k2, (N, C, H, W), jnp.float32)
    weight = jax.random.uniform(k3, (N, C, H, W), jnp.float32)

    loss_fn = MSELoss(loss_weight=1.0, reduction='mean')

    # unweighted mean
    out = loss_fn(pred, target)
    jax.block_until_ready(out)
    ref = jnp.mean((pred - target) ** 2)
    assert jnp.allclose(out, ref, rtol=1e-5, atol=1e-6), (out, ref)

    # weighted mean (basicsr semantics: sum(loss*w) / sum(w))
    out_w = loss_fn(pred, target, weight=weight)
    jax.block_until_ready(out_w)
    ref_w = jnp.sum((pred - target) ** 2 * weight) / jnp.sum(weight)
    assert jnp.allclose(out_w, ref_w, rtol=1e-5, atol=1e-6), (out_w, ref_w)

    # channel-broadcast weight (N,1,H,W): denominator is weight.sum() * C
    w_c = jax.random.uniform(k3, (N, 1, H, W), jnp.float32)
    out_wc = loss_fn(pred, target, weight=w_c)
    ref_wc = (jnp.sum((pred - target) ** 2 * jnp.broadcast_to(w_c, pred.shape))
              / (jnp.sum(w_c) * C))
    assert jnp.allclose(out_wc, ref_wc, rtol=1e-5, atol=1e-6), (out_wc, ref_wc)

    # reduction='none' with weight and a non-unit loss_weight (folded in-kernel)
    out_none = MSELoss(loss_weight=0.5, reduction='none')(pred, target, weight=weight)
    ref_none = 0.5 * (pred - target) ** 2 * weight
    assert out_none.shape == (N, C, H, W) and out_none.dtype == pred.dtype
    assert jnp.allclose(out_none, ref_none, rtol=1e-5, atol=1e-6)

    # reduction='sum'
    out_sum = MSELoss(reduction='sum')(pred, target)
    assert jnp.allclose(out_sum, jnp.sum((pred - target) ** 2), rtol=1e-5)

    # ragged size (not lane/block aligned): exercises the flatten-pad + slice paths
    rp = jax.random.normal(k2, (3, 5, 7, 11), jnp.float32)
    rt = jax.random.normal(k3, (3, 5, 7, 11), jnp.float32)
    out_rn = MSELoss(reduction='none')(rp, rt)
    assert out_rn.shape == rp.shape
    assert jnp.allclose(out_rn, (rp - rt) ** 2, rtol=1e-5, atol=1e-6)
    out_rm = MSELoss(reduction='mean')(rp, rt)
    assert jnp.allclose(out_rm, jnp.mean((rp - rt) ** 2), rtol=1e-5, atol=1e-6)

    # larger case: exercises multi-block tiling and the gated partial-block mask
    kp, kt, kw = jax.random.split(k1, 3)
    big_p = jax.random.normal(kp, (4, 4, 256, 320), jnp.float32)   # rows = 10240
    big_t = jax.random.normal(kt, (4, 4, 256, 320), jnp.float32)
    big_w = jax.random.uniform(kw, (4, 4, 256, 320), jnp.float32)
    out_big = MSELoss(reduction='mean')(big_p, big_t)
    jax.block_until_ready(out_big)
    ref_big = jnp.mean((big_p - big_t) ** 2)
    assert jnp.allclose(out_big, ref_big, rtol=1e-4, atol=1e-6), (out_big, ref_big)
    out_big_w = MSELoss(reduction='mean')(big_p, big_t, weight=big_w)
    ref_big_w = jnp.sum((big_p - big_t) ** 2 * big_w) / jnp.sum(big_w)
    assert jnp.allclose(out_big_w, ref_big_w, rtol=1e-4, atol=1e-6), (out_big_w, ref_big_w)

    # bf16 inputs: dtype-aware block sizing; result dtype follows pred.dtype
    out_bf = MSELoss(reduction='mean')(pred.astype(jnp.bfloat16),
                                       target.astype(jnp.bfloat16))
    jax.block_until_ready(out_bf)
    assert out_bf.dtype == jnp.bfloat16
    assert jnp.allclose(out_bf.astype(jnp.float32), ref, rtol=5e-2, atol=1e-3)

    print("KERNEL_OK")
</pallas_src>

<mosaic_0001>
module attributes {stable_mosaic.version = 11 : i64} {
  func.func @_reduce_kernel(%arg0: i32, %arg1: i32, %arg2: memref<32x128xf32, #tpu.memory_space<vmem>>, %arg3: memref<32x128xf32, #tpu.memory_space<vmem>>, %arg4: memref<8x128xf32, #tpu.memory_space<vmem>>) attributes {dimension_semantics = [#tpu.dimension_semantics<parallel>, #tpu.dimension_semantics<arbitrary>], iteration_bounds = array<i64: 1, 1>, scalar_prefetch = 0 : i64, scratch_operands = 0 : i64, tpu.core_type = #tpu.core_type<tc>, window_params = [{transform_indices = @transform_0, window_bounds = array<i64: 32, 128>}, {transform_indices = @transform_1, window_bounds = array<i64: 32, 128>}, {transform_indices = @transform_2, window_bounds = array<i64: 8, 128>}]} {
    %c0 = arith.constant 0 : index
    %c0_0 = arith.constant 0 : index
    %0 = vector.load %arg2[%c0, %c0_0] : memref<32x128xf32, #tpu.memory_space<vmem>>, vector<32x128xf32>
    %c0_1 = arith.constant 0 : index
    %c0_2 = arith.constant 0 : index
    %1 = vector.load %arg3[%c0_1, %c0_2] : memref<32x128xf32, #tpu.memory_space<vmem>>, vector<32x128xf32>
    %2 = arith.subf %0, %1 : vector<32x128xf32>
    %3 = arith.mulf %2, %2 : vector<32x128xf32>
    %c0_i32 = arith.constant 0 : i32
    %4 = arith.cmpi eq, %arg1, %c0_i32 : i32
    %5 = arith.extui %4 : i1 to i32
    %c0_i32_3 = arith.constant 0 : i32
    %6 = arith.cmpi ne, %5, %c0_i32_3 : i32
    scf.if %6 {
      %cst_8 = arith.constant 0.000000e+00 : f32
      %12 = vector.broadcast %cst_8 : f32 to vector<8x128xf32>
      %c0_9 = arith.constant 0 : index
      %c0_10 = arith.constant 0 : index
      %13 = vector.load %arg4[%c0_9, %c0_10] : memref<8x128xf32, #tpu.memory_space<vmem>>, vector<8x128xf32>
      tpu.vector_store %arg4[%c0_9, %c0_10], %12 {strides = array<i32>} : memref<8x128xf32, #tpu.memory_space<vmem>>, vector<8x128xf32>,
    } else {
    }
    %c0_4 = arith.constant 0 : index
    %c0_5 = arith.constant 0 : index
    %7 = vector.load %arg4[%c0_4, %c0_5] : memref<8x128xf32, #tpu.memory_space<vmem>>, vector<8x128xf32>
    %8 = vector.shape_cast %3 : vector<32x128xf32> to vector<4x8x128xf32>
    %cst = arith.constant dense<0.000000e+00> : vector<8x128xf32>
    %9 = vector.multi_reduction <add>, %8, %cst [0] : vector<4x8x128xf32> to vector<8x128xf32>
    %10 = arith.addf %7, %9 : vector<8x128xf32>
    %c0_6 = arith.constant 0 : index
    %c0_7 = arith.constant 0 : index
    %11 = vector.load %arg4[%c0_6, %c0_7] : memref<8x128xf32, #tpu.memory_space<vmem>>, vector<8x128xf32>
    tpu.vector_store %arg4[%c0_6, %c0_7], %10 {strides = array<i32>} : memref<8x128xf32, #tpu.memory_space<vmem>>, vector<8x128xf32>,
    return
  }
  func.func @transform_0(%arg0: i32, %arg1: i32) -> (i32, i32) {
    %c1_i32 = arith.constant 1 : i32
    %0 = arith.muli %arg0, %c1_i32 : i32
    %1 = arith.addi %0, %arg1 : i32
    %c0_i32 = arith.constant 0 : i32
    %c0_i32_0 = arith.constant 0 : i32
    return %1, %c0_i32 : i32, i32
  }
  func.func @transform_1(%arg0: i32, %arg1: i32) -> (i32, i32) {
    %c1_i32 = arith.constant 1 : i32
    %0 = arith.muli %arg0, %c1_i32 : i32
    %1 = arith.addi %0, %arg1 : i32
    %c0_i32 = arith.constant 0 : i32
    %c0_i32_0 = arith.constant 0 : i32
    return %1, %c0_i32 : i32, i32
  }
  func.func @transform_2(%arg0: i32, %arg1: i32) -> (i32, i32) {
    %c0_i32 = arith.constant 0 : i32
    %c0_i32_0 = arith.constant 0 : i32
    return %arg0, %c0_i32 : i32, i32
  }
}

</mosaic_0001>

<llo_original>
// kernel: tpu_custom_call.1
$region0: #{tpu_custom_call.1}
  #allocation0 [shape = 'u32[]', space=smem, size = 0x4, offset = 0x4, fixed_abs, tag = 'smem constant byte address 0x4 - core index']
  #allocation1 [shape = 'u32[72,128]{1,0:T(1,128)}', space=vmem, size = 0x9000, scoped, tag = 'internal scratch']
  %s0 = inlined_call_operand.hbm [shape: f32[32,128], index: 0, kind: input, shape index: {}]
  %s1 = inlined_call_operand.hbm [shape: f32[32,128], index: 1, kind: input, shape index: {}]
  %s2 = inlined_call_operand.hbm [shape: f32[8,128], index: 2, kind: output, shape index: {}]
  %s3 = sld [smem:[#allocation0]]
  $region30: #{tpu_custom_call.1} parent=0
    _
  %s5 = ssub.s32 1, %s3
  %s6 = scalar_select 0, %s5, %s3
  $region1: #{tpu_custom_call.1} parent=0
    #allocation2 [shape = 'u8[16384]{0}', space=vmem, size = 0x4000, scoped, tag = 'input window, operand 0, single buffered']
    #allocation3 [shape = 's32[1]{0}', space=sflag, size = 0x4, scoped, tag = 'scoped memory for tpu_custom_call.1']
    #allocation4 [shape = 's32[1]{0}', space=sflag, size = 0x4, scoped, tag = 'scoped memory for tpu_custom_call.1']
    #allocation5 [shape = 'u8[16384]{0}', space=vmem, size = 0x4000, scoped, tag = 'input window, operand 1, single buffered']
    #allocation6 [shape = 's32[1]{0}', space=sflag, size = 0x4, scoped, tag = 'scoped memory for tpu_custom_call.1']
    #allocation7 [shape = 'u8[4096]{0}', space=vmem, size = 0x1000, scoped, tag = 'output window, operand 0, single buffered']
    %7 = vsyncpa [#allocation3], 0
    %8 = vsyncpa [#allocation6], 0
    %9 = vsyncpa [#allocation4], 0
    // Predicated region
    $region2: #{tpu_custom_call.1} parent=1 // pred_check
      _
    $region3: #{tpu_custom_call.1} parent=1 // pred_check_branch
      %11 = sbr.rel (0) target = $region5
    $region4: #{tpu_custom_call.1} parent=1 // pred_region
      %s12 = sadd.s32 0, 0
      %s13 = smul.u32 4, %s12
      %15 = vsyncadd [#allocation3], 0
      %s16 = smul.addr %s13, 8
      %s17 = scalar_lea.hbm %s0, %s16
      %s18 = sshll.u32 %s17, 4
      %s19 = int_to_ptr.hbm [resolvable:$true] %s18
      %s20 = sshll.u32 [#allocation2], 4
      %s21 = int_to_ptr.vmem [resolvable:$true] %s20
      %26 = dma.hbm_to_vmem [thread:$0]  %s19, 512, %s21, [#allocation3], 128, 128, 8
    $region5: #{tpu_custom_call.1} parent=1 // pred_fallthru
      _
    // Predicated region
    $region6: #{tpu_custom_call.1} parent=1 // pred_check
      _
    $region7: #{tpu_custom_call.1} parent=1 // pred_check_branch
      %28 = sbr.rel (0) target = $region9
    $region8: #{tpu_custom_call.1} parent=1 // pred_region
      %s29 = sadd.s32 0, 0
      %s30 = smul.u32 4, %s29
      %32 = vsyncadd [#allocation6], 0
      %s33 = smul.addr %s30, 8
      %s34 = scalar_lea.hbm %s1, %s33
      %s35 = sshll.u32 %s34, 4
      %s36 = int_to_ptr.hbm [resolvable:$true] %s35
      %s37 = sshll.u32 [#allocation5], 4
      %s38 = int_to_ptr.vmem [resolvable:$true] %s37
      %43 = dma.hbm_to_vmem [thread:$0]  %s36, 512, %s38, [#allocation6], 128, 128, 8
    $region9: #{tpu_custom_call.1} parent=1 // pred_fallthru
      _
    // Predicated region
    $region10: #{tpu_custom_call.1} parent=1 // pred_check
      _
    $region11: #{tpu_custom_call.1} parent=1 // pred_check_branch
      %45 = sbr.rel (0) target = $region13
    $region12: #{tpu_custom_call.1} parent=1 // pred_region
      %47 = dma.done [#allocation3], 512
    $region13: #{tpu_custom_call.1} parent=1 // pred_fallthru
      _
    // Predicated region
    $region14: #{tpu_custom_call.1} parent=1 // pred_check
      _
    $region15: #{tpu_custom_call.1} parent=1 // pred_check_branch
      %49 = sbr.rel (0) target = $region17
    $region16: #{tpu_custom_call.1} parent=1 // pred_region
      %51 = dma.done [#allocation6], 512
    $region17: #{tpu_custom_call.1} parent=1 // pred_fallthru
      _
    %s52 = sadd.s32 0, 0
    %s53 = smul.u32 4, %s52
    %s54 = sadd.s32 0, 0
    %s55 = smul.u32 4, %s54
    %v56 = vld [vmem:[#allocation2] sm:$0xff]
    %v57 = vld [vmem:[#allocation2 + $0x8] sm:$0xff]
    %v58 = vld [vmem:[#allocation2 + $0x10] sm:$0xff]
    %v59 = vld [vmem:[#allocation2 + $0x18] sm:$0xff]
    %v60 = vld [vmem:[#allocation5] sm:$0xff]
    %v61 = vld [vmem:[#allocation5 + $0x8] sm:$0xff]
    %v62 = vld [vmem:[#allocation5 + $0x10] sm:$0xff]
    %v63 = vld [vmem:[#allocation5 + $0x18] sm:$0xff]
    %v64 = vsub.f32 %v56, %v60
    %v65 = vsub.f32 %v57, %v61
    %v66 = vsub.f32 %v58, %v62
    %v67 = vsub.f32 %v59, %v63
    %v68 = vmul.f32 %v64, %v64
    %v69 = vmul.f32 %v65, %v65
    %v70 = vmul.f32 %v66, %v66
    %v71 = vmul.f32 %v67, %v67
    %p72 = scmp.eq.s32.totalorder 0, 0
    // Predicated region
    $region18: #{tpu_custom_call.1} parent=1 // pred_check
      %p73 = pneg %p72
    $region19: #{tpu_custom_call.1} parent=1 // pred_check_branch
      %75 = sbr.rel (%p73) target = $region21
    $region20: #{tpu_custom_call.1} parent=1 // pred_region
      %76 = vst [vmem:[#allocation7] sm:$0xff] 0.0
    $region21: #{tpu_custom_call.1} parent=1 // pred_fallthru
      _
    %v77 = vld [vmem:[#allocation7] sm:$0xff]
    %v78 = vadd.f32 %v68, %v69
    %v79 = vadd.f32 %v78, %v70
    %v80 = vadd.f32 %v79, %v71
    %v81 = vadd.f32 %v77, %v80
    %82 = vst [vmem:[#allocation7] sm:$0xff] %v81
    // Predicated region
    $region22: #{tpu_custom_call.1} parent=1 // pred_check
      _
    $region23: #{tpu_custom_call.1} parent=1 // pred_check_branch
      %84 = sbr.rel (0) target = $region25
    $region24: #{tpu_custom_call.1} parent=1 // pred_region
      %86 = vsyncadd [#allocation4], 0
      %s88 = sshll.u32 [#allocation7], 4
      %s89 = int_to_ptr.vmem [resolvable:$true] %s88
      %s90 = sshll.u32 %s2, 4
      %s91 = int_to_ptr.hbm [resolvable:$true] %s90
      %93 = dma.vmem_to_hbm [thread:$0]  %s89, 128, %s91, [#allocation4]
    $region25: #{tpu_custom_call.1} parent=1 // pred_fallthru
      _
    // Predicated region
    $region26: #{tpu_custom_call.1} parent=1 // pred_check
      _
    $region27: #{tpu_custom_call.1} parent=1 // pred_check_branch
      %95 = sbr.rel (0) target = $region29
    $region28: #{tpu_custom_call.1} parent=1 // pred_region
      %97 = dma.done [#allocation4], 128
    $region29: #{tpu_custom_call.1} parent=1 // pred_fallthru
      _
    %98 = vsyncpa [#allocation3], 1
    %99 = vsyncpa [#allocation6], 1
    %100 = vsyncpa [#allocation4], 1

</llo_original>
